<compile_context>
chip_gen: v5e
topology: v5e:2x2
jax: 0.10.0
libtpu: 0.0.40
codegen_flags: <defaults>
</compile_context>

<pallas_src>
import jax
import jax.numpy as jnp
from jax.experimental import pallas as pl
from jax.experimental.pallas import tpu as pltpu


_LANE = 128
_NEG_INF = jnp.float32(-1e30)


def _round_up(n, m):
    return ((n + m - 1) // m) * m


def _make_mlp_kernel(num_layers):
    """Fused MLP kernel.

    Ref layout: (x_ref, w0, b0, ..., w_{L-1}, b_{L-1}, out_ref)
      x_ref:   (TB, I)        input rows for this grid block
      w_k:     (in_k, out_k)  transposed, lane-padded weights
      b_k:     (1, out_k)     biases (last layer holds -1e30 in padded lanes)
      out_ref: (TB, OP)       softmax probabilities, OP = 128-padded out dim
    """

    def kernel(*refs):
        x_ref = refs[0]
        out_ref = refs[-1]

        h = x_ref[...]  # activations stay in vregs across layers
        for li in range(num_layers):
            w_ref = refs[1 + 2 * li]
            b_ref = refs[2 + 2 * li]
            h = jnp.dot(h, w_ref[...],
                        preferred_element_type=jnp.float32) + b_ref[...]
            if li < num_layers - 1:
                h = jax.nn.sigmoid(h)          # EUP transcendental
            else:
                # Padded lanes already hold -1e30 (baked into the bias), so a
                # plain numerically-stable softmax gives them probability 0.
                m = jnp.max(h, axis=1, keepdims=True)
                e = jnp.exp(h - m)
                s = jnp.sum(e, axis=1, keepdims=True)
                out_ref[...] = e / s           # exact divide: rows sum to 1

    return kernel


def _pad_params(params):
    """Lane-pad every layer to a multiple of 128 output columns.

    * Padded weight columns are zero.
    * Padded weight rows (= next layer's padded input dim) are zero, so the
      sigmoid(0)=0.5 values in padded activation lanes never leak forward.
    * Hidden biases are zero-padded; the last bias is padded with -1e30 so the
      softmax padding mask is free (no iota/select in the kernel).
    """
    num_layers = len(params)
    padded = []
    prev_out_pad = params[0][0].shape[0]  # first layer input dim (unpadded x)
    for li, (w, b) in enumerate(params):
        in_dim, out_dim = w.shape
        in_pad = prev_out_pad
        out_pad = _round_up(out_dim, _LANE)
        w_p = jnp.zeros((in_pad, out_pad), jnp.float32)
        w_p = w_p.at[:in_dim, :out_dim].set(w)
        if li == num_layers - 1:
            b_p = jnp.full((1, out_pad), _NEG_INF, jnp.float32)
        else:
            b_p = jnp.zeros((1, out_pad), jnp.float32)
        b_p = b_p.at[:, :out_dim].set(b)
        padded.append((w_p, b_p))
        prev_out_pad = out_pad
    return padded


def mlp_policy_forward(x, params, *, max_block_rows=128):
    """params: list of (w_t, b) pairs, w_t shaped (in, out), b shaped (1, out)."""
    B, I = x.shape
    num_layers = len(params)
    out_dim = params[-1][0].shape[1]

    padded_params = _pad_params(params)
    padded_out = padded_params[-1][0].shape[1]

    # Fat row tiles: whole batch in one grid step when it fits, else 128-row
    # blocks; pad the batch up instead of asserting on divisibility.
    block_rows = min(B, max_block_rows)
    b_pad = _round_up(B, block_rows)
    x_in = x if b_pad == B else jnp.zeros((b_pad, I), x.dtype).at[:B].set(x)
    grid = (b_pad // block_rows,)

    in_specs = [pl.BlockSpec((block_rows, I), lambda i: (i, 0))]
    flat_args = [x_in]
    for (w, b) in padded_params:
        # Constant blocks across the grid: single-buffer them (their block
        # index never changes, double-buffering would just waste VMEM + DMAs).
        in_specs.append(pl.BlockSpec(w.shape, lambda i: (0, 0),
                                     pipeline_mode=pl.Buffered(1)))
        in_specs.append(pl.BlockSpec(b.shape, lambda i: (0, 0),
                                     pipeline_mode=pl.Buffered(1)))
        flat_args.extend([w, b])
    out_spec = pl.BlockSpec((block_rows, padded_out), lambda i: (i, 0))

    # Only shard across TensorCores when there is more than one row block.
    semantics = ("parallel",) if grid[0] > 1 else ("arbitrary",)

    kernel = _make_mlp_kernel(num_layers)
    out_padded = pl.pallas_call(
        kernel,
        out_shape=jax.ShapeDtypeStruct((b_pad, padded_out), jnp.float32),
        grid_spec=pltpu.PrefetchScalarGridSpec(
            num_scalar_prefetch=0,
            grid=grid,
            in_specs=in_specs,
            out_specs=out_spec,
        ),
        compiler_params=pltpu.CompilerParams(dimension_semantics=semantics),
    )(*flat_args)

    return out_padded[:B, :out_dim]


def init_params(key, input_dim, hidden_dims, output_dim):
    """Mirror PyTorch nn.Linear init: U(-1/sqrt(fan_in), 1/sqrt(fan_in)).

    Weights are stored transposed, i.e. (in_features, out_features).
    """
    dims = [input_dim] + list(hidden_dims) + [output_dim]
    keys = jax.random.split(key, 2 * (len(dims) - 1))
    params = []
    for li in range(len(dims) - 1):
        fan_in, fan_out = dims[li], dims[li + 1]
        k = 1.0 / jnp.sqrt(jnp.float32(fan_in))
        w = jax.random.uniform(keys[2 * li], (fan_in, fan_out),
                               jnp.float32, -k, k)
        b = jax.random.uniform(keys[2 * li + 1], (1, fan_out),
                               jnp.float32, -k, k)
        params.append((w, b))
    return params


def mlp_policy_reference(x, params):
    """Pure-JAX reference matching MLPPolicy.forward (Sigmoid hidden, Softmax out)."""
    h = x
    for li, (w, b) in enumerate(params):
        h = h @ w + b
        if li < len(params) - 1:
            h = jax.nn.sigmoid(h)
        else:
            h = jax.nn.softmax(h, axis=1)
    return h


if __name__ == "__main__":
    BATCH, INPUT_DIM, HIDDEN_DIMS, OUTPUT_DIM = 16, 4, [32, 32], 2

    key = jax.random.PRNGKey(0)
    k_x, k_p = jax.random.split(key)
    x = jax.random.normal(k_x, (BATCH, INPUT_DIM), jnp.float32)
    params = init_params(k_p, INPUT_DIM, HIDDEN_DIMS, OUTPUT_DIM)

    out = mlp_policy_forward(x, params)
    out = jax.block_until_ready(out)

    ref = mlp_policy_reference(x, params)
    assert out.shape == (BATCH, OUTPUT_DIM)
    assert jnp.allclose(out, ref, atol=2e-3, rtol=2e-3), "mismatch vs JAX reference"
    assert jnp.allclose(jnp.sum(out, axis=1), 1.0, atol=1e-4), "rows must sum to 1"

    # TODO(synk): Categorical sampling / optimizer in trainer.py are training-time
    # utilities, not part of MLPPolicy.forward, so they are not implemented here.

    print("KERNEL_OK")
</pallas_src>

<mosaic_0001>
module attributes {stable_mosaic.version = 11 : i64} {
  func.func @kernel(%arg0: i32, %arg1: memref<16x4xf32, #tpu.memory_space<vmem>>, %arg2: memref<4x128xf32, #tpu.memory_space<vmem>>, %arg3: memref<1x128xf32, #tpu.memory_space<vmem>>, %arg4: memref<128x128xf32, #tpu.memory_space<vmem>>, %arg5: memref<1x128xf32, #tpu.memory_space<vmem>>, %arg6: memref<128x128xf32, #tpu.memory_space<vmem>>, %arg7: memref<1x128xf32, #tpu.memory_space<vmem>>, %arg8: memref<16x128xf32, #tpu.memory_space<vmem>>) attributes {dimension_semantics = [#tpu.dimension_semantics<arbitrary>], iteration_bounds = array<i64: 1>, scalar_prefetch = 0 : i64, scratch_operands = 0 : i64, tpu.core_type = #tpu.core_type<tc>, window_params = [{transform_indices = @transform_0, window_bounds = array<i64: 16, 4>}, {pipeline_mode = #tpu.pipeline_mode<synchronous>, transform_indices = @transform_1, window_bounds = array<i64: 4, 128>}, {pipeline_mode = #tpu.pipeline_mode<synchronous>, transform_indices = @transform_2, window_bounds = array<i64: 1, 128>}, {pipeline_mode = #tpu.pipeline_mode<synchronous>, transform_indices = @transform_3, window_bounds = array<i64: 128, 128>}, {pipeline_mode = #tpu.pipeline_mode<synchronous>, transform_indices = @transform_4, window_bounds = array<i64: 1, 128>}, {pipeline_mode = #tpu.pipeline_mode<synchronous>, transform_indices = @transform_5, window_bounds = array<i64: 128, 128>}, {pipeline_mode = #tpu.pipeline_mode<synchronous>, transform_indices = @transform_6, window_bounds = array<i64: 1, 128>}, {transform_indices = @transform_7, window_bounds = array<i64: 16, 128>}]} {
    %c0 = arith.constant 0 : index
    %c0_0 = arith.constant 0 : index
    %0 = vector.load %arg1[%c0, %c0_0] : memref<16x4xf32, #tpu.memory_space<vmem>>, vector<16x4xf32>
    %c0_1 = arith.constant 0 : index
    %c0_2 = arith.constant 0 : index
    %1 = vector.load %arg2[%c0_1, %c0_2] : memref<4x128xf32, #tpu.memory_space<vmem>>, vector<4x128xf32>
    %cst = arith.constant dense<0.000000e+00> : vector<16x128xf32>
    %2 = tpu.matmul %0, %1, %cst {dimension_numbers = #tpu.dot_dimension_numbers<[1], [0], [0], [1], [0, 0, 1, 1], [], []>} : vector<16x4xf32>, vector<4x128xf32>, vector<16x128xf32> -> vector<16x128xf32>
    %c0_3 = arith.constant 0 : index
    %c0_4 = arith.constant 0 : index
    %3 = vector.load %arg3[%c0_3, %c0_4] : memref<1x128xf32, #tpu.memory_space<vmem>>, vector<1x128xf32>
    %4 = vector.broadcast %3 : vector<1x128xf32> to vector<16x128xf32>
    %5 = arith.addf %2, %4 : vector<16x128xf32>
    %6 = arith.negf %5 : vector<16x128xf32>
    %7 = math.exp %6 : vector<16x128xf32>
    %cst_5 = arith.constant 1.000000e+00 : f32
    %8 = vector.broadcast %cst_5 : f32 to vector<16x128xf32>
    %9 = arith.addf %8, %7 : vector<16x128xf32>
    %10 = arith.divf %8, %9 : vector<16x128xf32>
    %c0_6 = arith.constant 0 : index
    %c0_7 = arith.constant 0 : index
    %11 = vector.load %arg4[%c0_6, %c0_7] : memref<128x128xf32, #tpu.memory_space<vmem>>, vector<128x128xf32>
    %cst_8 = arith.constant dense<0.000000e+00> : vector<16x128xf32>
    %12 = tpu.matmul %10, %11, %cst_8 {dimension_numbers = #tpu.dot_dimension_numbers<[1], [0], [0], [1], [0, 0, 1, 1], [], []>} : vector<16x128xf32>, vector<128x128xf32>, vector<16x128xf32> -> vector<16x128xf32>
    %c0_9 = arith.constant 0 : index
    %c0_10 = arith.constant 0 : index
    %13 = vector.load %arg5[%c0_9, %c0_10] : memref<1x128xf32, #tpu.memory_space<vmem>>, vector<1x128xf32>
    %14 = vector.broadcast %13 : vector<1x128xf32> to vector<16x128xf32>
    %15 = arith.addf %12, %14 : vector<16x128xf32>
    %16 = arith.negf %15 : vector<16x128xf32>
    %17 = math.exp %16 : vector<16x128xf32>
    %cst_11 = arith.constant 1.000000e+00 : f32
    %18 = vector.broadcast %cst_11 : f32 to vector<16x128xf32>
    %19 = arith.addf %18, %17 : vector<16x128xf32>
    %20 = arith.divf %18, %19 : vector<16x128xf32>
    %c0_12 = arith.constant 0 : index
    %c0_13 = arith.constant 0 : index
    %21 = vector.load %arg6[%c0_12, %c0_13] : memref<128x128xf32, #tpu.memory_space<vmem>>, vector<128x128xf32>
    %cst_14 = arith.constant dense<0.000000e+00> : vector<16x128xf32>
    %22 = tpu.matmul %20, %21, %cst_14 {dimension_numbers = #tpu.dot_dimension_numbers<[1], [0], [0], [1], [0, 0, 1, 1], [], []>} : vector<16x128xf32>, vector<128x128xf32>, vector<16x128xf32> -> vector<16x128xf32>
    %c0_15 = arith.constant 0 : index
    %c0_16 = arith.constant 0 : index
    %23 = vector.load %arg7[%c0_15, %c0_16] : memref<1x128xf32, #tpu.memory_space<vmem>>, vector<1x128xf32>
    %24 = vector.broadcast %23 : vector<1x128xf32> to vector<16x128xf32>
    %25 = arith.addf %22, %24 : vector<16x128xf32>
    %cst_17 = arith.constant dense<0xFF800000> : vector<16xf32>
    %26 = vector.multi_reduction <maximumf>, %25, %cst_17 [1] : vector<16x128xf32> to vector<16xf32>
    %27 = vector.shape_cast %26 : vector<16xf32> to vector<16x1xf32>
    %28 = vector.broadcast %27 : vector<16x1xf32> to vector<16x128xf32>
    %29 = arith.subf %25, %28 : vector<16x128xf32>
    %30 = math.exp %29 : vector<16x128xf32>
    %cst_18 = arith.constant dense<0.000000e+00> : vector<16xf32>
    %31 = vector.multi_reduction <add>, %30, %cst_18 [1] : vector<16x128xf32> to vector<16xf32>
    %32 = vector.shape_cast %31 : vector<16xf32> to vector<16x1xf32>
    %33 = vector.broadcast %32 : vector<16x1xf32> to vector<16x128xf32>
    %34 = arith.divf %30, %33 : vector<16x128xf32>
    %c0_19 = arith.constant 0 : index
    %c0_20 = arith.constant 0 : index
    %35 = vector.load %arg8[%c0_19, %c0_20] : memref<16x128xf32, #tpu.memory_space<vmem>>, vector<16x128xf32>
    tpu.vector_store %arg8[%c0_19, %c0_20], %34 {strides = array<i32>} : memref<16x128xf32, #tpu.memory_space<vmem>>, vector<16x128xf32>,
    return
  }
  func.func @transform_0(%arg0: i32) -> (i32, i32) {
    %c0_i32 = arith.constant 0 : i32
    %c0_i32_0 = arith.constant 0 : i32
    return %arg0, %c0_i32 : i32, i32
  }
  func.func @transform_1(%arg0: i32) -> (i32, i32) {
    %c0_i32 = arith.constant 0 : i32
    %c0_i32_0 = arith.constant 0 : i32
    %c0_i32_1 = arith.constant 0 : i32
    return %c0_i32, %c0_i32_0 : i32, i32
  }
  func.func @transform_2(%arg0: i32) -> (i32, i32) {
    %c0_i32 = arith.constant 0 : i32
    %c0_i32_0 = arith.constant 0 : i32
    %c0_i32_1 = arith.constant 0 : i32
    return %c0_i32, %c0_i32_0 : i32, i32
  }
  func.func @transform_3(%arg0: i32) -> (i32, i32) {
    %c0_i32 = arith.constant 0 : i32
    %c0_i32_0 = arith.constant 0 : i32
    %c0_i32_1 = arith.constant 0 : i32
    return %c0_i32, %c0_i32_0 : i32, i32
  }
  func.func @transform_4(%arg0: i32) -> (i32, i32) {
    %c0_i32 = arith.constant 0 : i32
    %c0_i32_0 = arith.constant 0 : i32
    %c0_i32_1 = arith.constant 0 : i32
    return %c0_i32, %c0_i32_0 : i32, i32
  }
  func.func @transform_5(%arg0: i32) -> (i32, i32) {
    %c0_i32 = arith.constant 0 : i32
    %c0_i32_0 = arith.constant 0 : i32
    %c0_i32_1 = arith.constant 0 : i32
    return %c0_i32, %c0_i32_0 : i32, i32
  }
  func.func @transform_6(%arg0: i32) -> (i32, i32) {
    %c0_i32 = arith.constant 0 : i32
    %c0_i32_0 = arith.constant 0 : i32
    %c0_i32_1 = arith.constant 0 : i32
    return %c0_i32, %c0_i32_0 : i32, i32
  }
  func.func @transform_7(%arg0: i32) -> (i32, i32) {
    %c0_i32 = arith.constant 0 : i32
    %c0_i32_0 = arith.constant 0 : i32
    return %arg0, %c0_i32 : i32, i32
  }
}

</mosaic_0001>

<llo_original>
// kernel: tpu_custom_call.1
$region0: #{tpu_custom_call.1}
  #allocation0 [shape = 'u32[]', space=smem, size = 0x4, offset = 0x4, fixed_abs, tag = 'smem constant byte address 0x4 - core index']
  #allocation1 [shape = 'u32[72,128]{1,0:T(1,128)}', space=vmem, size = 0x9000, scoped, tag = 'internal scratch']
  %s0 = inlined_call_operand.vmem [shape: f32[16,4], index: 0, kind: input, shape index: {}]
  %s1 = inlined_call_operand.vmem [shape: f32[4,128], index: 1, kind: input, shape index: {}]
  %s2 = inlined_call_operand.vmem [shape: f32[1,128], index: 2, kind: input, shape index: {}]
  %s3 = inlined_call_operand.hbm [shape: f32[128,128], index: 3, kind: input, shape index: {}]
  %s4 = inlined_call_operand.vmem [shape: f32[1,128], index: 4, kind: input, shape index: {}]
  %s5 = inlined_call_operand.hbm [shape: f32[128,128], index: 5, kind: input, shape index: {}]
  %s6 = inlined_call_operand.vmem [shape: f32[1,128], index: 6, kind: input, shape index: {}]
  %s7 = inlined_call_operand.hbm [shape: f32[16,128], index: 7, kind: output, shape index: {}]
  %s8 = sld [smem:[#allocation0]]
  $region46: #{tpu_custom_call.1} parent=0
    _
  %s10 = ssub.s32 1, %s8
  %s11 = scalar_select 0, %s10, %s8
  $region1: #{tpu_custom_call.1} parent=0
    #allocation2 [shape = 'u8[65536]{0}', space=vmem, size = 0x10000, scoped, tag = 'input window, operand 3, single buffered']
    #allocation3 [shape = 's32[1]{0}', space=sflag, size = 0x4, scoped, tag = 'scoped memory for tpu_custom_call.1']
    #allocation4 [shape = 's32[1]{0}', space=sflag, size = 0x4, scoped, tag = 'scoped memory for tpu_custom_call.1']
    #allocation5 [shape = 'u8[65536]{0}', space=vmem, size = 0x10000, scoped, tag = 'input window, operand 5, single buffered']
    #allocation6 [shape = 's32[1]{0}', space=sflag, size = 0x4, scoped, tag = 'scoped memory for tpu_custom_call.1']
    #allocation7 [shape = 'u8[8192]{0}', space=vmem, size = 0x2000, scoped, tag = 'output window, operand 0, single buffered']
    %12 = vsyncpa [#allocation3], 0
    %13 = vsyncpa [#allocation6], 0
    %14 = vsyncpa [#allocation4], 0
    // Predicated region
    $region2: #{tpu_custom_call.1} parent=1 // pred_check
      _
    $region3: #{tpu_custom_call.1} parent=1 // pred_check_branch
      %16 = sbr.rel (0) target = $region5
    $region4: #{tpu_custom_call.1} parent=1 // pred_region
      _
    $region5: #{tpu_custom_call.1} parent=1 // pred_fallthru
      _
    // Predicated region
    $region6: #{tpu_custom_call.1} parent=1 // pred_check
      _
    $region7: #{tpu_custom_call.1} parent=1 // pred_check_branch
      %18 = sbr.rel (0) target = $region9
    $region8: #{tpu_custom_call.1} parent=1 // pred_region
      _
    $region9: #{tpu_custom_call.1} parent=1 // pred_fallthru
      _
    // Predicated region
    $region10: #{tpu_custom_call.1} parent=1 // pred_check
      _
    $region11: #{tpu_custom_call.1} parent=1 // pred_check_branch
      %20 = sbr.rel (0) target = $region13
    $region12: #{tpu_custom_call.1} parent=1 // pred_region
      _
    $region13: #{tpu_custom_call.1} parent=1 // pred_fallthru
      _
    // Predicated region
    $region14: #{tpu_custom_call.1} parent=1 // pred_check
      _
    $region15: #{tpu_custom_call.1} parent=1 // pred_check_branch
      %22 = sbr.rel (0) target = $region17
    $region16: #{tpu_custom_call.1} parent=1 // pred_region
      %24 = vsyncadd [#allocation3], 0
      %s25 = sshll.u32 %s3, 4
      %s26 = int_to_ptr.hbm [resolvable:$true] %s25
      %s27 = sshll.u32 [#allocation2], 4
      %s28 = int_to_ptr.vmem [resolvable:$true] %s27
      %33 = dma.hbm_to_vmem [thread:$0]  %s26, 2048, %s28, [#allocation3], 128, 128, 8
    $region17: #{tpu_custom_call.1} parent=1 // pred_fallthru
      _
    // Predicated region
    $region18: #{tpu_custom_call.1} parent=1 // pred_check
      _
    $region19: #{tpu_custom_call.1} parent=1 // pred_check_branch
      %35 = sbr.rel (0) target = $region21
    $region20: #{tpu_custom_call.1} parent=1 // pred_region
      _
    $region21: #{tpu_custom_call.1} parent=1 // pred_fallthru
      _
    // Predicated region
    $region22: #{tpu_custom_call.1} parent=1 // pred_check
      _
    $region23: #{tpu_custom_call.1} parent=1 // pred_check_branch
      %37 = sbr.rel (0) target = $region25
    $region24: #{tpu_custom_call.1} parent=1 // pred_region
      %39 = vsyncadd [#allocation6], 0
      %s40 = sshll.u32 %s5, 4
      %s41 = int_to_ptr.hbm [resolvable:$true] %s40
      %s42 = sshll.u32 [#allocation5], 4
      %s43 = int_to_ptr.vmem [resolvable:$true] %s42
      %48 = dma.hbm_to_vmem [thread:$0]  %s41, 2048, %s43, [#allocation6], 128, 128, 8
    $region25: #{tpu_custom_call.1} parent=1 // pred_fallthru
      _
    // Predicated region
    $region26: #{tpu_custom_call.1} parent=1 // pred_check
      _
    $region27: #{tpu_custom_call.1} parent=1 // pred_check_branch
      %50 = sbr.rel (0) target = $region29
    $region28: #{tpu_custom_call.1} parent=1 // pred_region
      _
    $region29: #{tpu_custom_call.1} parent=1 // pred_fallthru
      _
    // Predicated region
    $region30: #{tpu_custom_call.1} parent=1 // pred_check
      _
    $region31: #{tpu_custom_call.1} parent=1 // pred_check_branch
      %52 = sbr.rel (0) target = $region33
    $region32: #{tpu_custom_call.1} parent=1 // pred_region
      %54 = dma.done [#allocation3], 2048
    $region33: #{tpu_custom_call.1} parent=1 // pred_fallthru
      _
    // Predicated region
    $region34: #{tpu_custom_call.1} parent=1 // pred_check
      _
    $region35: #{tpu_custom_call.1} parent=1 // pred_check_branch
      %56 = sbr.rel (0) target = $region37
    $region36: #{tpu_custom_call.1} parent=1 // pred_region
      %58 = dma.done [#allocation6], 2048
    $region37: #{tpu_custom_call.1} parent=1 // pred_fallthru
      _
    %v59 = vld [vmem:[%s0] sm:$0xff]
    %v60 = vld [vmem:[%s0 + $0x8] sm:$0xff]
    %v61 = vld [vmem:[%s1] sm:$0xf]
    %v62 = vld [vmem:[%s2] sm:$0x1]
    %v64 = vperm.slane %v62, 0
    %vm66 = vcmask 31744
    %v68 = vsel %vm66, %v59, 0
    %v71 = vsel %vm66, %v60, 0
    %vm73 = vcmask 1043456
    %v75 = vsel %vm73, %v61, 0
    %77 = vmatpush.msra.mxu0 0.0
    %78 = vmatpush.msra.mxu0 0.0
    %79 = vmatpush.msra.mxu0 0.0
    %80 = vmatpush.msra.mxu0 0.0
    %81 = vmatpush.msra.mxu0 0.0
    %82 = vmatpush.msra.mxu0 0.0
    %83 = vmatpush.msra.mxu0 0.0
    %84 = vmatpush.msra.mxu0 0.0
    %85 = vmatpush.msra.mxu0 0.0
    %86 = vmatpush.msra.mxu0 0.0
    %87 = vmatpush.msra.mxu0 0.0
    %88 = vmatpush.msra.mxu0 0.0
    %89 = vmatpush.msra.mxu0 0.0
    %90 = vmatpush.msra.mxu0 0.0
    %91 = vmatpush.msra.mxu0 0.0
    %92 = vmatpush.msra.mxu0 %v75
    %93 = vmatmul.f32.gmra.mxu0 %v68
    %v94 = vpop.f32.mrf.mxu0
    %v95 = vadd.f32 %v64, %v94
    %96 = vmatmul.f32.gmra.mxu0 %v71
    %v97 = vpop.f32.mrf.mxu0
    %v98 = vadd.f32 %v64, %v97
    %99 = vdwg.mxu0
    %v100 = vxor.u32 %v95, 2147483648
    %v101 = vxor.u32 %v98, 2147483648
    %v102 = vmul.f32 %v100, 1.442695
    %v103 = vpow.pop %v102
    %v104 = vmul.f32 %v101, 1.442695
    %v105 = vpow.pop %v104
    %v106 = vadd.f32 %v103, 1.0
    %v107 = vadd.f32 %v105, 1.0
    %v108 = vrcp.pop %v106
    %v109 = vmul.f32 %v106, %v108
    %v110 = vsub.f32 1.0, %v109
    %v111 = vmul.f32 %v108, %v110
    %v112 = vadd.f32 %v108, %v111
    %vm113 = vweird.f32 %v106
    %vm114 = vweird.f32 %v108
    %vm115 = vmor %vm113, %vm114
    %v116 = vsel %vm115, %v108, %v112
    %v117 = vand.u32 2147483647, %v106
    %vm118 = vcmp.eq.f32.partialorder %v117, 8.507059e+37
    %v119 = vand.u32 %v106, 2147483648
    %v120 = vor.u32 1.1754944e-38, %v119
    %v121 = vsel %vm118, %v120, %v116
    %v122 = vmul.f32 1.0, %v121
    %v123 = vrcp.pop %v107
    %v124 = vmul.f32 %v107, %v123
    %v125 = vsub.f32 1.0, %v124
    %v126 = vmul.f32 %v123, %v125
    %v127 = vadd.f32 %v123, %v126
    %vm128 = vweird.f32 %v107
    %vm129 = vweird.f32 %v123
    %vm130 = vmor %vm128, %vm129
    %v131 = vsel %vm130, %v123, %v127
    %v132 = vand.u32 2147483647, %v107
    %vm133 = vcmp.eq.f32.partialorder %v132, 8.507059e+37
    %v134 = vand.u32 %v107, 2147483648
    %v135 = vor.u32 1.1754944e-38, %v134
    %v136 = vsel %vm133, %v135, %v131
    %v137 = vmul.f32 1.0, %v136
    %v138 = vld [vmem:[#allocation2] sm:$0xff]
    %v139 = vld [vmem:[#allocation2 + $0x8] sm:$0xff]
    %v140 = vld [vmem:[#allocation2 + $0x10] sm:$0xff]
    %v141 = vld [vmem:[#allocation2 + $0x18] sm:$0xff]
    %v142 = vld [vmem:[#allocation2 + $0x20] sm:$0xff]
    %v143 = vld [vmem:[#allocation2 + $0x28] sm:$0xff]
    %v144 = vld [vmem:[#allocation2 + $0x30] sm:$0xff]
    %v145 = vld [vmem:[#allocation2 + $0x38] sm:$0xff]
    %v146 = vld [vmem:[#allocation2 + $0x40] sm:$0xff]
    %v147 = vld [vmem:[#allocation2 + $0x48] sm:$0xff]
    %v148 = vld [vmem:[#allocation2 + $0x50] sm:$0xff]
    %v149 = vld [vmem:[#allocation2 + $0x58] sm:$0xff]
    %v150 = vld [vmem:[#allocation2 + $0x60] sm:$0xff]
    %v151 = vld [vmem:[#allocation2 + $0x68] sm:$0xff]
    %v152 = vld [vmem:[#allocation2 + $0x70] sm:$0xff]
    %v153 = vld [vmem:[#allocation2 + $0x78] sm:$0xff]
    %v154 = vld [vmem:[%s4] sm:$0x1]
    %v156 = vperm.slane %v154, 0
    %158 = vmatpush.msra.mxu0 %v153
    %159 = vmatpush.msra.mxu0 %v152
    %160 = vmatpush.msra.mxu0 %v151
    %161 = vmatpush.msra.mxu0 %v150
    %162 = vmatpush.msra.mxu0 %v149
    %163 = vmatpush.msra.mxu0 %v148
    %164 = vmatpush.msra.mxu0 %v147
    %165 = vmatpush.msra.mxu0 %v146
    %166 = vmatpush.msra.mxu0 %v145
    %167 = vmatpush.msra.mxu0 %v144
    %168 = vmatpush.msra.mxu0 %v143
    %169 = vmatpush.msra.mxu0 %v142
    %170 = vmatpush.msra.mxu0 %v141
    %171 = vmatpush.msra.mxu0 %v140
    %172 = vmatpush.msra.mxu0 %v139
    %173 = vmatpush.msra.mxu0 %v138
    %174 = vmatmul.f32.gmra.mxu0 %v122
    %v175 = vpop.f32.mrf.mxu0
    %v176 = vadd.f32 %v156, %v175
    %177 = vmatmul.f32.gmra.mxu0 %v137
    %v178 = vpop.f32.mrf.mxu0
    %v179 = vadd.f32 %v156, %v178
    %180 = vdwg.mxu0
    %v181 = vxor.u32 %v176, 2147483648
    %v182 = vxor.u32 %v179, 2147483648
    %v183 = vmul.f32 %v181, 1.442695
    %v184 = vpow.pop %v183
    %v185 = vmul.f32 %v182, 1.442695
    %v186 = vpow.pop %v185
    %v187 = vadd.f32 %v184, 1.0
    %v188 = vadd.f32 %v186, 1.0
    %v189 = vrcp.pop %v187
    %v190 = vmul.f32 %v187, %v189
    %v191 = vsub.f32 1.0, %v190
    %v192 = vmul.f32 %v189, %v191
    %v193 = vadd.f32 %v189, %v192
    %vm194 = vweird.f32 %v187
    %vm195 = vweird.f32 %v189
    %vm196 = vmor %vm194, %vm195
    %v197 = vsel %vm196, %v189, %v193
    %v198 = vand.u32 2147483647, %v187
    %vm199 = vcmp.eq.f32.partialorder %v198, 8.507059e+37
    %v200 = vand.u32 %v187, 2147483648
    %v201 = vor.u32 1.1754944e-38, %v200
    %v202 = vsel %vm199, %v201, %v197
    %v203 = vmul.f32 1.0, %v202
    %v204 = vrcp.pop %v188
    %v205 = vmul.f32 %v188, %v204
    %v206 = vsub.f32 1.0, %v205
    %v207 = vmul.f32 %v204, %v206
    %v208 = vadd.f32 %v204, %v207
    %vm209 = vweird.f32 %v188
    %vm210 = vweird.f32 %v204
    %vm211 = vmor %vm209, %vm210
    %v212 = vsel %vm211, %v204, %v208
    %v213 = vand.u32 2147483647, %v188
    %vm214 = vcmp.eq.f32.partialorder %v213, 8.507059e+37
    %v215 = vand.u32 %v188, 2147483648
    %v216 = vor.u32 1.1754944e-38, %v215
    %v217 = vsel %vm214, %v216, %v212
    %v218 = vmul.f32 1.0, %v217
    %v219 = vld [vmem:[#allocation5] sm:$0xff]
    %v220 = vld [vmem:[#allocation5 + $0x8] sm:$0xff]
    %v221 = vld [vmem:[#allocation5 + $0x10] sm:$0xff]
    %v222 = vld [vmem:[#allocation5 + $0x18] sm:$0xff]
    %v223 = vld [vmem:[#allocation5 + $0x20] sm:$0xff]
    %v224 = vld [vmem:[#allocation5 + $0x28] sm:$0xff]
    %v225 = vld [vmem:[#allocation5 + $0x30] sm:$0xff]
    %v226 = vld [vmem:[#allocation5 + $0x38] sm:$0xff]
    %v227 = vld [vmem:[#allocation5 + $0x40] sm:$0xff]
    %v228 = vld [vmem:[#allocation5 + $0x48] sm:$0xff]
    %v229 = vld [vmem:[#allocation5 + $0x50] sm:$0xff]
    %v230 = vld [vmem:[#allocation5 + $0x58] sm:$0xff]
    %v231 = vld [vmem:[#allocation5 + $0x60] sm:$0xff]
    %v232 = vld [vmem:[#allocation5 + $0x68] sm:$0xff]
    %v233 = vld [vmem:[#allocation5 + $0x70] sm:$0xff]
    %v234 = vld [vmem:[#allocation5 + $0x78] sm:$0xff]
    %v235 = vld [vmem:[%s6] sm:$0x1]
    %v237 = vperm.slane %v235, 0
    %239 = vmatpush.msra.mxu0 %v234
    %240 = vmatpush.msra.mxu0 %v233
    %241 = vmatpush.msra.mxu0 %v232
    %242 = vmatpush.msra.mxu0 %v231
    %243 = vmatpush.msra.mxu0 %v230
    %244 = vmatpush.msra.mxu0 %v229
    %245 = vmatpush.msra.mxu0 %v228
    %246 = vmatpush.msra.mxu0 %v227
    %247 = vmatpush.msra.mxu0 %v226
    %248 = vmatpush.msra.mxu0 %v225
    %249 = vmatpush.msra.mxu0 %v224
    %250 = vmatpush.msra.mxu0 %v223
    %251 = vmatpush.msra.mxu0 %v222
    %252 = vmatpush.msra.mxu0 %v221
    %253 = vmatpush.msra.mxu0 %v220
    %254 = vmatpush.msra.mxu0 %v219
    %255 = vmatmul.f32.gmra.mxu0 %v203
    %v256 = vpop.f32.mrf.mxu0
    %v257 = vadd.f32 %v237, %v256
    %258 = vmatmul.f32.gmra.mxu0 %v218
    %v259 = vpop.f32.mrf.mxu0
    %v260 = vadd.f32 %v237, %v259
    %261 = vdwg.mxu0
    %262 = vmax.xlane.f32.xlu0 %v257
    %v263 = vpop.xlane.xlu0 %262
    %264 = vmax.xlane.f32.xlu0 %v260
    %v265 = vpop.xlane.xlu0 %264
    %v266 = vsub.f32 %v257, %v263
    %v267 = vsub.f32 %v260, %v265
    %v268 = vmul.f32 %v266, 1.442695
    %v269 = vpow.pop %v268
    %v270 = vmul.f32 %v267, 1.442695
    %v271 = vpow.pop %v270
    %272 = vadd.xlane.f32.xlu0 %v269
    %v273 = vpop.xlane.xlu0 %272
    %274 = vadd.xlane.f32.xlu0 %v271
    %v275 = vpop.xlane.xlu0 %274
    %v276 = vrcp.pop %v273
    %v277 = vmul.f32 %v273, %v276
    %v278 = vsub.f32 1.0, %v277
    %v279 = vmul.f32 %v276, %v278
    %v280 = vadd.f32 %v276, %v279
    %vm281 = vweird.f32 %v273
    %vm282 = vweird.f32 %v276
    %vm283 = vmor %vm281, %vm282
    %v284 = vsel %vm283, %v276, %v280
    %v285 = vand.u32 2147483647, %v273
    %vm286 = vcmp.eq.f32.partialorder %v285, 8.507059e+37
    %v287 = vand.u32 %v273, 2147483648
    %v288 = vor.u32 1.1754944e-38, %v287
    %v289 = vsel %vm286, %v288, %v284
    %v290 = vmul.f32 %v269, %v289
    %v291 = vrcp.pop %v275
    %v292 = vmul.f32 %v275, %v291
    %v293 = vsub.f32 1.0, %v292
    %v294 = vmul.f32 %v291, %v293
    %v295 = vadd.f32 %v291, %v294
    %vm296 = vweird.f32 %v275
    %vm297 = vweird.f32 %v291
    %vm298 = vmor %vm296, %vm297
    %v299 = vsel %vm298, %v291, %v295
    %v300 = vand.u32 2147483647, %v275
    %vm301 = vcmp.eq.f32.partialorder %v300, 8.507059e+37
    %v302 = vand.u32 %v275, 2147483648
    %v303 = vor.u32 1.1754944e-38, %v302
    %v304 = vsel %vm301, %v303, %v299
    %v305 = vmul.f32 %v271, %v304
    %306 = vst [vmem:[#allocation7] sm:$0xff] %v290
    %307 = vst [vmem:[#allocation7 + $0x8] sm:$0xff] %v305
    // Predicated region
    $region38: #{tpu_custom_call.1} parent=1 // pred_check
      _
    $region39: #{tpu_custom_call.1} parent=1 // pred_check_branch
      %309 = sbr.rel (0) target = $region41
    $region40: #{tpu_custom_call.1} parent=1 // pred_region
      %311 = vsyncadd [#allocation4], 0
      %s312 = sshll.u32 [#allocation7], 4
      %s313 = int_to_ptr.vmem [resolvable:$true] %s312
      %s314 = sshll.u32 %s7, 4
      %s315 = int_to_ptr.hbm [resolvable:$true] %s314
      %320 = dma.vmem_to_hbm [thread:$0]  %s313, 256, %s315, [#allocation4], 128, 128, 8
    $region41: #{tpu_custom_call.1} parent=1 // pred_fallthru
      _
    // Predicated region
    $region42: #{tpu_custom_call.1} parent=1 // pred_check
      _
    $region43: #{tpu_custom_call.1} parent=1 // pred_check_branch
      %322 = sbr.rel (0) target = $region45
    $region44: #{tpu_custom_call.1} parent=1 // pred_region
      %324 = dma.done [#allocation4], 256
    $region45: #{tpu_custom_call.1} parent=1 // pred_fallthru
      _
    %325 = vsyncpa [#allocation3], 1
    %326 = vsyncpa [#allocation6], 1
    %327 = vsyncpa [#allocation4], 1

</llo_original>
